<compile_context>
chip_gen: v5e
topology: v5e:2x2
jax: 0.10.0
libtpu: 0.0.40
codegen_flags: <defaults>
</compile_context>

<pallas_src>
import math
import functools

import jax
import jax.numpy as jnp
from jax import lax
from jax.experimental import pallas as pl
from jax.experimental.pallas import tpu as pltpu


# ------------------------------- recurrent kernel -------------------------------
def _gru_layer_kernel(len_ref, gi_ref, h0_ref, bhn_ref, w_hh_ref,
                      out_ref, h_scratch, *, unroll):
    c = pl.program_id(0)          # time-chunk index (sequential)
    Tc = gi_ref.shape[0]
    H = h0_ref.shape[-1]

    @pl.when(c == 0)
    def _init():
        h_scratch[...] = h0_ref[...].astype(jnp.float32)

    lengths = len_ref[...]                     # (B, 1) int32
    b_hh_n = bhn_ref[...]                      # (1, H)  f32: the n-slice of b_hh
    w_hh = w_hh_ref[...]                       # (H, 3H) MXU dtype; loaded once per chunk
    t0 = c * Tc

    def step(tl, h):
        # gi already contains b_ih + b_ch + b_zh + b_hh[r,i] + cj@W_ch^T + he@W_zh^T
        # (all folded in the wrapper), so the step body is just gi + h@W_hh gate math.
        gi = gi_ref[tl].astype(jnp.float32)                    # (B, 3H)
        gh = jnp.dot(h.astype(w_hh.dtype), w_hh,
                     preferred_element_type=jnp.float32)       # (B, 3H), only per-step matmul
        resetgate = jax.nn.sigmoid(gi[:, :H] + gh[:, :H])
        inputgate = jax.nn.sigmoid(gi[:, H:2 * H] + gh[:, H:2 * H])
        newgate = jnp.tanh(gi[:, 2 * H:] + resetgate * (gh[:, 2 * H:] + b_hh_n))
        hy = newgate + inputgate * (h - newgate)

        # Length masking, faithful to the PyTorch code:
        #   h_next = h_next * mask + hx[0] * (1 - mask)
        # where hx is the previous hidden TENSOR (B, H), so hx[0] is its first ROW
        # broadcast over the batch (quirk of the original module, reproduced exactly).
        # Implemented as one boolean select instead of a float blend.
        keep = (t0 + tl) < lengths                              # (B, 1) bool
        h_next = jnp.where(keep, hy, h[0:1, :])

        out_ref[tl] = h_next.astype(out_ref.dtype)
        return h_next

    h_scratch[...] = lax.fori_loop(0, Tc, step, h_scratch[...], unroll=unroll)


def gru_layer_pallas(gi_all, h0, b_hh_n, lengths, w_hh_t, *,
                     time_chunk=32, unroll=None, out_dtype=jnp.float32):
    """Runs one CustomGRUCell over the whole sequence.

    gi_all: (T, B, 3H) precomputed input gates with ALL time-invariant additive terms
            (biases + cj/he conditioning gates) folded in.
    """
    T, B, H3 = gi_all.shape
    H = H3 // 3
    Tc = max(1, min(int(time_chunk), T))
    num_chunks = pl.cdiv(T, Tc)
    T_pad = num_chunks * Tc
    if T_pad != T:
        # Padded tail steps compute masked garbage (sliced off below); the carried state
        # past T is never read (h_n comes from out[T-1], not the scratch).
        gi_all = jnp.pad(gi_all, ((0, T_pad - T), (0, 0), (0, 0)))

    if unroll is None:
        # ~2*B*3H f32 of gi/gh live per unrolled step; keep the unrolled window modest so
        # the body isn't spill-bound at large B*H (review item).
        live = 2 * B * H3 * 4
        unroll = 8 if live <= 32 * 1024 else (4 if live <= 64 * 1024 else 2)
    unroll = max(1, min(int(unroll), Tc))

    # Explicit scoped-VMEM limit sized from the actual buffers (double-buffered streams +
    # default-double-buffered constants + scratch), with padding allowance, clamped to
    # [16 MiB, 48 MiB] so it is valid on v5e/v6e (128 MiB phys) and v7x (64 MiB phys).
    gi_bytes = jnp.dtype(gi_all.dtype).itemsize
    out_bytes = jnp.dtype(out_dtype).itemsize
    w_bytes = jnp.dtype(w_hh_t.dtype).itemsize
    needed = (2 * Tc * B * H3 * gi_bytes            # gi stream
              + 2 * Tc * B * H * out_bytes          # out stream
              + 2 * (8 * 128 * 4                    # lengths (padded)
                     + B * H * 4                    # h0
                     + 8 * H * 4                    # b_hh n-slice (padded)
                     + H * H3 * w_bytes)            # w_hh
              + B * H * 4)                          # scratch carry
    vmem_limit = int(min(max(2 * needed + (2 << 20), 16 << 20), 48 << 20))

    const2 = lambda c: (0, 0)
    grid_spec = pltpu.PrefetchScalarGridSpec(
        num_scalar_prefetch=0,
        grid=(num_chunks,),
        in_specs=[
            pl.BlockSpec((B, 1), const2),                       # lengths
            pl.BlockSpec((Tc, B, H3), lambda c: (c, 0, 0)),     # gi chunk (streamed)
            pl.BlockSpec((B, H), const2),                       # h0
            pl.BlockSpec((1, H), const2),                       # b_hh n-slice
            pl.BlockSpec((H, H3), const2),                      # w_hh^T (only resident weight)
        ],
        out_specs=pl.BlockSpec((Tc, B, H), lambda c: (c, 0, 0)),
        scratch_shapes=[pltpu.VMEM((B, H), jnp.float32)],       # recurrent hidden carry
    )
    out = pl.pallas_call(
        functools.partial(_gru_layer_kernel, unroll=unroll),
        out_shape=jax.ShapeDtypeStruct((T_pad, B, H), out_dtype),
        grid_spec=grid_spec,
        compiler_params=pltpu.CompilerParams(
            dimension_semantics=("arbitrary",),   # recurrence -> sequential grid axis
            vmem_limit_bytes=vmem_limit),
    )(lengths, gi_all, h0.astype(jnp.float32), b_hh_n, w_hh_t)
    return out[:T] if T_pad != T else out


# ------------------------------- parameter prep (once) -------------------------------
def prepare_gru_params(params, mxu_dtype=jnp.float32):
    """Transpose / cast / split biases once, outside the per-call hot path."""
    prepared = []
    for p in params:
        H3 = p["w_hh"].shape[0]
        H = H3 // 3
        b_hh = jnp.asarray(p["b_hh"], jnp.float32)
        prepared.append(dict(
            w_ih_t=jnp.asarray(p["w_ih"], jnp.float32).T.astype(mxu_dtype),   # (I, 3H)
            w_hh_t=jnp.asarray(p["w_hh"], jnp.float32).T.astype(mxu_dtype),   # (H, 3H)
            w_ch_t=jnp.asarray(p["w_ch"], jnp.float32).T.astype(mxu_dtype),   # (H, 3H)
            w_zh_t=jnp.asarray(p["w_zh"], jnp.float32).T.astype(mxu_dtype),   # (H, 3H)
            b_ih=jnp.asarray(p["b_ih"], jnp.float32).reshape(1, H3),
            b_ch=jnp.asarray(p["b_ch"], jnp.float32).reshape(1, H3),
            b_zh=jnp.asarray(p["b_zh"], jnp.float32).reshape(1, H3),
            # b_hh r/i slices are folded into gi; only the n-slice is needed in-kernel
            # (it sits inside the resetgate multiplication).
            b_hh_ri=jnp.concatenate(
                [b_hh[:2 * H], jnp.zeros((H,), jnp.float32)]).reshape(1, H3),
            b_hh_n=b_hh[2 * H:].reshape(1, H),
        ))
    return prepared


# ------------------------------- full module forward -------------------------------
def custom_gru_forward(x, prepared_params, lengths=None, hx=None, cj=None, he=None,
                       batch_first=False, time_chunk=32, gi_store_dtype=None):
    """Mirrors CustomGRU.forward (dropout=0 -> identity).

    x: (T, B, input_size) (or (B, T, input_size) if batch_first).
    prepared_params: output of prepare_gru_params (per-layer dicts).
    gi_store_dtype: storage dtype of the streamed gi slabs (defaults to the weight dtype;
                    keep f32 on v5e even with bf16 weights — no native bf16 VPU there).
    Returns (output (T,B,H), h_n (num_layers,B,H)).
    """
    if batch_first:
        x = jnp.transpose(x, (1, 0, 2))
    T, B, _ = x.shape
    num_layers = len(prepared_params)
    H = prepared_params[0]["w_hh_t"].shape[0]
    mxu_dtype = prepared_params[0]["w_hh_t"].dtype
    gi_dtype = mxu_dtype if gi_store_dtype is None else gi_store_dtype

    if lengths is None:
        lengths = jnp.full((B,), T, dtype=jnp.int32)
    len2 = jnp.asarray(lengths, jnp.int32).reshape(B, 1)
    if hx is None:
        h0 = jnp.zeros((B, H), dtype=jnp.float32)
        hx = tuple(h0 for _ in range(num_layers))

    # TODO(synk): nn.Dropout between layers is identity for dropout=0 (eval); p>0 not implemented.
    layer_input = x
    h_n = []
    for layer in range(num_layers):
        p = prepared_params[layer]
        in_dim = layer_input.shape[-1]

        # All time-invariant additive terms, folded once per layer (review item #1):
        #   b_ih + b_hh[r,i] + b_ch + cj@W_ch^T  (+ b_zh + he@W_zh^T when he is given).
        # Matches the PyTorch cell: the gz term (incl. b_zh) exists only when he is not None.
        gcz = (p["b_ih"] + p["b_hh_ri"] + p["b_ch"]
               + jnp.dot(cj.astype(mxu_dtype), p["w_ch_t"],
                         preferred_element_type=jnp.float32))
        if he is not None:
            gcz = gcz + p["b_zh"] + jnp.dot(he[layer].astype(mxu_dtype), p["w_zh_t"],
                                            preferred_element_type=jnp.float32)

        # Hoisted input projection: one dense matmul per layer with good MXU occupancy.
        gi_all = jnp.dot(layer_input.reshape(T * B, in_dim).astype(mxu_dtype),
                         p["w_ih_t"], preferred_element_type=jnp.float32)
        gi_all = (gi_all.reshape(T, B, 3 * H) + gcz[None]).astype(gi_dtype)

        # Intermediate layers emit in the MXU dtype (next layer's gi matmul consumes it
        # anyway) to halve inter-layer HBM traffic; the final layer emits x.dtype.
        layer_out_dtype = mxu_dtype if layer < num_layers - 1 else x.dtype
        out = gru_layer_pallas(gi_all, hx[layer], p["b_hh_n"], len2, p["w_hh_t"],
                               time_chunk=time_chunk, out_dtype=layer_out_dtype)
        layer_input = out
        h_n.append(out[-1].astype(x.dtype))
    return layer_input.astype(x.dtype), jnp.stack(h_n, 0)


# ----------------------- pure-JAX reference (for verification) -----------------------
def _ref_cell(x_t, h, cj, he, p):
    gi = x_t @ p["w_ih"].T + p["b_ih"]
    gh = h @ p["w_hh"].T + p["b_hh"]
    gc = cj @ p["w_ch"].T + p["b_ch"]
    gz = he @ p["w_zh"].T + p["b_zh"]
    i_r, i_i, i_n = jnp.split(gi, 3, axis=1)
    h_r, h_i, h_n_ = jnp.split(gh, 3, axis=1)
    c_r, c_i, c_n = jnp.split(gc, 3, axis=1)
    z_r, z_i, z_n = jnp.split(gz, 3, axis=1)
    resetgate = jax.nn.sigmoid(i_r + h_r + c_r + z_r)
    inputgate = jax.nn.sigmoid(i_i + h_i + c_i + z_i)
    newgate = jnp.tanh(i_n + resetgate * h_n_ + c_n + z_n)
    return newgate + inputgate * (h - newgate)


def ref_forward(x, params, lengths, cj, he):
    T, B, _ = x.shape
    H = params[0]["w_hh"].shape[1]
    layer_input = x
    h_n = []
    for layer, p in enumerate(params):
        h = jnp.zeros((B, H), dtype=jnp.float32)
        outs = []
        for t in range(T):
            hy = _ref_cell(layer_input[t], h, cj, he[layer], p)
            mask = (t < lengths).astype(jnp.float32)[:, None]
            h_next = hy * mask + h[0] * (1.0 - mask)   # hx[0] row-broadcast quirk (faithful)
            outs.append(h_next)
            h = h_next
        layer_input = jnp.stack(outs, 0)
        h_n.append(h)
    return layer_input, jnp.stack(h_n, 0)


# -------------------------------------- main --------------------------------------
if __name__ == "__main__":
    T, B, I, H, L = 6, 8, 64, 128, 2   # seq, batch, input_size, hidden_size, num_layers

    key = jax.random.PRNGKey(0)
    stdv = 1.0 / math.sqrt(H)

    def uniform(k, shape):
        return jax.random.uniform(k, shape, jnp.float32, minval=-stdv, maxval=stdv)

    params = []
    for layer in range(L):
        in_dim = I if layer == 0 else H
        key, *ks = jax.random.split(key, 9)
        params.append(dict(
            w_ih=uniform(ks[0], (3 * H, in_dim)),
            w_hh=uniform(ks[1], (3 * H, H)),
            w_ch=uniform(ks[2], (3 * H, H)),
            w_zh=uniform(ks[3], (3 * H, H)),
            b_ih=uniform(ks[4], (3 * H,)),
            b_hh=uniform(ks[5], (3 * H,)),
            b_ch=uniform(ks[6], (3 * H,)),
            b_zh=uniform(ks[7], (3 * H,)),
        ))

    key, kx, kc, kh = jax.random.split(key, 4)
    x = jax.random.normal(kx, (T, B, I), jnp.float32)
    cj = jax.random.normal(kc, (B, H), jnp.float32)
    he = jax.random.normal(kh, (L, B, H), jnp.float32)
    lengths = jnp.array([T, T - 2, T, T - 1, 3, T, 2, T], dtype=jnp.int32)

    fwd = jax.jit(functools.partial(custom_gru_forward, batch_first=False, time_chunk=32))

    # f32 path: tight correctness check against the pure-JAX reference (this is the gate).
    prep_f32 = prepare_gru_params(params, mxu_dtype=jnp.float32)
    out, h_n = jax.block_until_ready(fwd(x, prep_f32, lengths=lengths, cj=cj, he=he))

    out_ref, h_n_ref = ref_forward(x, params, lengths, cj, he)
    assert out.shape == (T, B, H) and h_n.shape == (L, B, H)
    assert jnp.allclose(out, out_ref, atol=1e-4, rtol=1e-4), "output mismatch vs reference"
    assert jnp.allclose(h_n, h_n_ref, atol=1e-4, rtol=1e-4), "h_n mismatch vs reference"

    # bf16 MXU-operand path (recommended on v6e/v7x): weights / gi / inter-layer outputs in
    # bf16, gate math + recurrent carry in f32. Loose sanity bound only (f32 is the gate).
    prep_bf16 = prepare_gru_params(params, mxu_dtype=jnp.bfloat16)
    out_bf, _ = jax.block_until_ready(fwd(x, prep_bf16, lengths=lengths, cj=cj, he=he))
    assert jnp.max(jnp.abs(out_bf - out_ref)) < 1e-1, "bf16 path diverged from reference"

    print("KERNEL_OK")
</pallas_src>

<mosaic_0001>
module attributes {stable_mosaic.version = 11 : i64} {
  func.func @_gru_layer_kernel(%arg0: i32, %arg1: memref<8x1xi32, #tpu.memory_space<vmem>>, %arg2: memref<6x8x384xf32, #tpu.memory_space<vmem>>, %arg3: memref<8x128xf32, #tpu.memory_space<vmem>>, %arg4: memref<1x128xf32, #tpu.memory_space<vmem>>, %arg5: memref<128x384xf32, #tpu.memory_space<vmem>>, %arg6: memref<6x8x128xf32, #tpu.memory_space<vmem>>, %arg7: memref<8x128xf32, #tpu.memory_space<vmem>>) attributes {dimension_semantics = [#tpu.dimension_semantics<arbitrary>], iteration_bounds = array<i64: 1>, scalar_prefetch = 0 : i64, scratch_operands = 1 : i64, tpu.core_type = #tpu.core_type<tc>, window_params = [{pipeline_mode = #tpu.pipeline_mode<synchronous>, transform_indices = @transform_0, window_bounds = array<i64: 8, 1>}, {transform_indices = @transform_1, window_bounds = array<i64: 6, 8, 384>}, {pipeline_mode = #tpu.pipeline_mode<synchronous>, transform_indices = @transform_2, window_bounds = array<i64: 8, 128>}, {pipeline_mode = #tpu.pipeline_mode<synchronous>, transform_indices = @transform_3, window_bounds = array<i64: 1, 128>}, {pipeline_mode = #tpu.pipeline_mode<synchronous>, transform_indices = @transform_4, window_bounds = array<i64: 128, 384>}, {transform_indices = @transform_5, window_bounds = array<i64: 6, 8, 128>}]} {
    %c0_i32 = arith.constant 0 : i32
    %0 = arith.cmpi eq, %arg0, %c0_i32 : i32
    %1 = arith.extui %0 : i1 to i32
    %c0_i32_0 = arith.constant 0 : i32
    %2 = arith.cmpi ne, %1, %c0_i32_0 : i32
    scf.if %2 {
      %c0_53 = arith.constant 0 : index
      %c0_54 = arith.constant 0 : index
      %267 = vector.load %arg3[%c0_53, %c0_54] : memref<8x128xf32, #tpu.memory_space<vmem>>, vector<8x128xf32>
      %c0_55 = arith.constant 0 : index
      %c0_56 = arith.constant 0 : index
      %268 = vector.load %arg7[%c0_55, %c0_56] : memref<8x128xf32, #tpu.memory_space<vmem>>, vector<8x128xf32>
      tpu.vector_store %arg7[%c0_55, %c0_56], %267 {strides = array<i32>} : memref<8x128xf32, #tpu.memory_space<vmem>>, vector<8x128xf32>,
    } else {
    }
    %c0 = arith.constant 0 : index
    %c0_1 = arith.constant 0 : index
    %3 = vector.load %arg1[%c0, %c0_1] : memref<8x1xi32, #tpu.memory_space<vmem>>, vector<8x1xi32>
    %c0_2 = arith.constant 0 : index
    %c0_3 = arith.constant 0 : index
    %4 = vector.load %arg4[%c0_2, %c0_3] : memref<1x128xf32, #tpu.memory_space<vmem>>, vector<1x128xf32>
    %c0_4 = arith.constant 0 : index
    %c0_5 = arith.constant 0 : index
    %5 = vector.load %arg5[%c0_4, %c0_5] : memref<128x384xf32, #tpu.memory_space<vmem>>, vector<128x384xf32>
    %c6_i32 = arith.constant 6 : i32
    %6 = arith.muli %arg0, %c6_i32 : i32
    %c0_6 = arith.constant 0 : index
    %c0_7 = arith.constant 0 : index
    %7 = vector.load %arg7[%c0_6, %c0_7] : memref<8x128xf32, #tpu.memory_space<vmem>>, vector<8x128xf32>
    %c0_i32_8 = arith.constant 0 : i32
    %8 = arith.index_cast %c0_i32_8 : i32 to index
    %c0_9 = arith.constant 0 : index
    %c0_10 = arith.constant 0 : index
    %9 = vector.load %arg2[%8, %c0_9, %c0_10] : memref<6x8x384xf32, #tpu.memory_space<vmem>>, vector<1x8x384xf32>
    %10 = vector.shape_cast %9 : vector<1x8x384xf32> to vector<8x384xf32>
    %cst = arith.constant dense<0.000000e+00> : vector<8x384xf32>
    %11 = tpu.matmul %7, %5, %cst {dimension_numbers = #tpu.dot_dimension_numbers<[1], [0], [0], [1], [0, 0, 1, 1], [], []>} : vector<8x128xf32>, vector<128x384xf32>, vector<8x384xf32> -> vector<8x384xf32>
    %12 = vector.extract_strided_slice %10 {offsets = [0, 0], sizes = [8, 128], strides = [1, 1]} : vector<8x384xf32> to vector<8x128xf32>
    %13 = vector.extract_strided_slice %11 {offsets = [0, 0], sizes = [8, 128], strides = [1, 1]} : vector<8x384xf32> to vector<8x128xf32>
    %14 = arith.addf %12, %13 : vector<8x128xf32>
    %15 = arith.negf %14 : vector<8x128xf32>
    %16 = math.exp %15 : vector<8x128xf32>
    %cst_11 = arith.constant 1.000000e+00 : f32
    %17 = vector.broadcast %cst_11 : f32 to vector<8x128xf32>
    %18 = arith.addf %17, %16 : vector<8x128xf32>
    %19 = arith.divf %17, %18 : vector<8x128xf32>
    %20 = vector.extract_strided_slice %10 {offsets = [0, 128], sizes = [8, 128], strides = [1, 1]} : vector<8x384xf32> to vector<8x128xf32>
    %21 = vector.extract_strided_slice %11 {offsets = [0, 128], sizes = [8, 128], strides = [1, 1]} : vector<8x384xf32> to vector<8x128xf32>
    %22 = arith.addf %20, %21 : vector<8x128xf32>
    %23 = arith.negf %22 : vector<8x128xf32>
    %24 = math.exp %23 : vector<8x128xf32>
    %cst_12 = arith.constant 1.000000e+00 : f32
    %25 = vector.broadcast %cst_12 : f32 to vector<8x128xf32>
    %26 = arith.addf %25, %24 : vector<8x128xf32>
    %27 = arith.divf %25, %26 : vector<8x128xf32>
    %28 = vector.extract_strided_slice %10 {offsets = [0, 256], sizes = [8, 128], strides = [1, 1]} : vector<8x384xf32> to vector<8x128xf32>
    %29 = vector.extract_strided_slice %11 {offsets = [0, 256], sizes = [8, 128], strides = [1, 1]} : vector<8x384xf32> to vector<8x128xf32>
    %30 = vector.broadcast %4 : vector<1x128xf32> to vector<8x128xf32>
    %31 = arith.addf %29, %30 : vector<8x128xf32>
    %32 = arith.mulf %19, %31 : vector<8x128xf32>
    %33 = arith.addf %28, %32 : vector<8x128xf32>
    %34 = math.tanh %33 : vector<8x128xf32>
    %35 = arith.subf %7, %34 : vector<8x128xf32>
    %36 = arith.mulf %27, %35 : vector<8x128xf32>
    %37 = arith.addf %34, %36 : vector<8x128xf32>
    %38 = arith.addi %6, %c0_i32_8 : i32
    %39 = vector.broadcast %38 : i32 to vector<8x1xi32>
    %40 = arith.cmpi slt, %39, %3 : vector<8x1xi32>
    %41 = vector.extract_strided_slice %7 {offsets = [0, 0], sizes = [1, 128], strides = [1, 1]} : vector<8x128xf32> to vector<1x128xf32>
    %42 = vector.shape_cast %40 : vector<8x1xi1> to vector<8x1xi1>
    %43 = vector.broadcast %42 : vector<8x1xi1> to vector<8x128xi1>
    %44 = vector.shape_cast %41 : vector<1x128xf32> to vector<1x128xf32>
    %45 = vector.broadcast %44 : vector<1x128xf32> to vector<8x128xf32>
    %46 = arith.select %43, %37, %45 : vector<8x128xi1>, vector<8x128xf32>
    %47 = arith.index_cast %c0_i32_8 : i32 to index
    %c0_13 = arith.constant 0 : index
    %c0_14 = arith.constant 0 : index
    %48 = vector.load %arg6[%47, %c0_13, %c0_14] : memref<6x8x128xf32, #tpu.memory_space<vmem>>, vector<1x8x128xf32>
    %49 = vector.shape_cast %48 : vector<1x8x128xf32> to vector<8x128xf32>
    %50 = vector.shape_cast %46 : vector<8x128xf32> to vector<1x8x128xf32>
    tpu.vector_store %arg6[%47, %c0_13, %c0_14], %50 {strides = array<i32>} : memref<6x8x128xf32, #tpu.memory_space<vmem>>, vector<1x8x128xf32>,
    %c1_i32 = arith.constant 1 : i32
    %51 = arith.index_cast %c1_i32 : i32 to index
    %c0_15 = arith.constant 0 : index
    %c0_16 = arith.constant 0 : index
    %52 = vector.load %arg2[%51, %c0_15, %c0_16] : memref<6x8x384xf32, #tpu.memory_space<vmem>>, vector<1x8x384xf32>
    %53 = vector.shape_cast %52 : vector<1x8x384xf32> to vector<8x384xf32>
    %cst_17 = arith.constant dense<0.000000e+00> : vector<8x384xf32>
    %54 = tpu.matmul %46, %5, %cst_17 {dimension_numbers = #tpu.dot_dimension_numbers<[1], [0], [0], [1], [0, 0, 1, 1], [], []>} : vector<8x128xf32>, vector<128x384xf32>, vector<8x384xf32> -> vector<8x384xf32>
    %55 = vector.extract_strided_slice %53 {offsets = [0, 0], sizes = [8, 128], strides = [1, 1]} : vector<8x384xf32> to vector<8x128xf32>
    %56 = vector.extract_strided_slice %54 {offsets = [0, 0], sizes = [8, 128], strides = [1, 1]} : vector<8x384xf32> to vector<8x128xf32>
    %57 = arith.addf %55, %56 : vector<8x128xf32>
    %58 = arith.negf %57 : vector<8x128xf32>
    %59 = math.exp %58 : vector<8x128xf32>
    %cst_18 = arith.constant 1.000000e+00 : f32
    %60 = vector.broadcast %cst_18 : f32 to vector<8x128xf32>
    %61 = arith.addf %60, %59 : vector<8x128xf32>
    %62 = arith.divf %60, %61 : vector<8x128xf32>
    %63 = vector.extract_strided_slice %53 {offsets = [0, 128], sizes = [8, 128], strides = [1, 1]} : vector<8x384xf32> to vector<8x128xf32>
    %64 = vector.extract_strided_slice %54 {offsets = [0, 128], sizes = [8, 128], strides = [1, 1]} : vector<8x384xf32> to vector<8x128xf32>
    %65 = arith.addf %63, %64 : vector<8x128xf32>
    %66 = arith.negf %65 : vector<8x128xf32>
    %67 = math.exp %66 : vector<8x128xf32>
    %cst_19 = arith.constant 1.000000e+00 : f32
    %68 = vector.broadcast %cst_19 : f32 to vector<8x128xf32>
    %69 = arith.addf %68, %67 : vector<8x128xf32>
    %70 = arith.divf %68, %69 : vector<8x128xf32>
    %71 = vector.extract_strided_slice %53 {offsets = [0, 256], sizes = [8, 128], strides = [1, 1]} : vector<8x384xf32> to vector<8x128xf32>
    %72 = vector.extract_strided_slice %54 {offsets = [0, 256], sizes = [8, 128], strides = [1, 1]} : vector<8x384xf32> to vector<8x128xf32>
    %73 = vector.broadcast %4 : vector<1x128xf32> to vector<8x128xf32>
    %74 = arith.addf %72, %73 : vector<8x128xf32>
    %75 = arith.mulf %62, %74 : vector<8x128xf32>
    %76 = arith.addf %71, %75 : vector<8x128xf32>
    %77 = math.tanh %76 : vector<8x128xf32>
    %78 = arith.subf %46, %77 : vector<8x128xf32>
    %79 = arith.mulf %70, %78 : vector<8x128xf32>
    %80 = arith.addf %77, %79 : vector<8x128xf32>
    %81 = arith.addi %6, %c1_i32 : i32
    %82 = vector.broadcast %81 : i32 to vector<8x1xi32>
    %83 = arith.cmpi slt, %82, %3 : vector<8x1xi32>
    %84 = vector.extract_strided_slice %46 {offsets = [0, 0], sizes = [1, 128], strides = [1, 1]} : vector<8x128xf32> to vector<1x128xf32>
    %85 = vector.shape_cast %83 : vector<8x1xi1> to vector<8x1xi1>
    %86 = vector.broadcast %85 : vector<8x1xi1> to vector<8x128xi1>
    %87 = vector.shape_cast %84 : vector<1x128xf32> to vector<1x128xf32>
    %88 = vector.broadcast %87 : vector<1x128xf32> to vector<8x128xf32>
    %89 = arith.select %86, %80, %88 : vector<8x128xi1>, vector<8x128xf32>
    %90 = arith.index_cast %c1_i32 : i32 to index
    %c0_20 = arith.constant 0 : index
    %c0_21 = arith.constant 0 : index
    %91 = vector.load %arg6[%90, %c0_20, %c0_21] : memref<6x8x128xf32, #tpu.memory_space<vmem>>, vector<1x8x128xf32>
    %92 = vector.shape_cast %91 : vector<1x8x128xf32> to vector<8x128xf32>
    %93 = vector.shape_cast %89 : vector<8x128xf32> to vector<1x8x128xf32>
    tpu.vector_store %arg6[%90, %c0_20, %c0_21], %93 {strides = array<i32>} : memref<6x8x128xf32, #tpu.memory_space<vmem>>, vector<1x8x128xf32>,
    %c2_i32 = arith.constant 2 : i32
    %94 = arith.index_cast %c2_i32 : i32 to index
    %c0_22 = arith.constant 0 : index
    %c0_23 = arith.constant 0 : index
    %95 = vector.load %arg2[%94, %c0_22, %c0_23] : memref<6x8x384xf32, #tpu.memory_space<vmem>>, vector<1x8x384xf32>
    %96 = vector.shape_cast %95 : vector<1x8x384xf32> to vector<8x384xf32>
    %cst_24 = arith.constant dense<0.000000e+00> : vector<8x384xf32>
    %97 = tpu.matmul %89, %5, %cst_24 {dimension_numbers = #tpu.dot_dimension_numbers<[1], [0], [0], [1], [0, 0, 1, 1], [], []>} : vector<8x128xf32>, vector<128x384xf32>, vector<8x384xf32> -> vector<8x384xf32>
    %98 = vector.extract_strided_slice %96 {offsets = [0, 0], sizes = [8, 128], strides = [1, 1]} : vector<8x384xf32> to vector<8x128xf32>
    %99 = vector.extract_strided_slice %97 {offsets = [0, 0], sizes = [8, 128], strides = [1, 1]} : vector<8x384xf32> to vector<8x128xf32>
    %100 = arith.addf %98, %99 : vector<8x128xf32>
    %101 = arith.negf %100 : vector<8x128xf32>
    %102 = math.exp %101 : vector<8x128xf32>
    %cst_25 = arith.constant 1.000000e+00 : f32
    %103 = vector.broadcast %cst_25 : f32 to vector<8x128xf32>
    %104 = arith.addf %103, %102 : vector<8x128xf32>
    %105 = arith.divf %103, %104 : vector<8x128xf32>
    %106 = vector.extract_strided_slice %96 {offsets = [0, 128], sizes = [8, 128], strides = [1, 1]} : vector<8x384xf32> to vector<8x128xf32>
    %107 = vector.extract_strided_slice %97 {offsets = [0, 128], sizes = [8, 128], strides = [1, 1]} : vector<8x384xf32> to vector<8x128xf32>
    %108 = arith.addf %106, %107 : vector<8x128xf32>
    %109 = arith.negf %108 : vector<8x128xf32>
    %110 = math.exp %109 : vector<8x128xf32>
    %cst_26 = arith.constant 1.000000e+00 : f32
    %111 = vector.broadcast %cst_26 : f32 to vector<8x128xf32>
    %112 = arith.addf %111, %110 : vector<8x128xf32>
    %113 = arith.divf %111, %112 : vector<8x128xf32>
    %114 = vector.extract_strided_slice %96 {offsets = [0, 256], sizes = [8, 128], strides = [1, 1]} : vector<8x384xf32> to vector<8x128xf32>
    %115 = vector.extract_strided_slice %97 {offsets = [0, 256], sizes = [8, 128], strides = [1, 1]} : vector<8x384xf32> to vector<8x128xf32>
    %116 = vector.broadcast %4 : vector<1x128xf32> to vector<8x128xf32>
    %117 = arith.addf %115, %116 : vector<8x128xf32>
    %118 = arith.mulf %105, %117 : vector<8x128xf32>
    %119 = arith.addf %114, %118 : vector<8x128xf32>
    %120 = math.tanh %119 : vector<8x128xf32>
    %121 = arith.subf %89, %120 : vector<8x128xf32>
    %122 = arith.mulf %113, %121 : vector<8x128xf32>
    %123 = arith.addf %120, %122 : vector<8x128xf32>
    %124 = arith.addi %6, %c2_i32 : i32
    %125 = vector.broadcast %124 : i32 to vector<8x1xi32>
    %126 = arith.cmpi slt, %125, %3 : vector<8x1xi32>
    %127 = vector.extract_strided_slice %89 {offsets = [0, 0], sizes = [1, 128], strides = [1, 1]} : vector<8x128xf32> to vector<1x128xf32>
    %128 = vector.shape_cast %126 : vector<8x1xi1> to vector<8x1xi1>
    %129 = vector.broadcast %128 : vector<8x1xi1> to vector<8x128xi1>
    %130 = vector.shape_cast %127 : vector<1x128xf32> to vector<1x128xf32>
    %131 = vector.broadcast %130 : vector<1x128xf32> to vector<8x128xf32>
    %132 = arith.select %129, %123, %131 : vector<8x128xi1>, vector<8x128xf32>
    %133 = arith.index_cast %c2_i32 : i32 to index
    %c0_27 = arith.constant 0 : index
    %c0_28 = arith.constant 0 : index
    %134 = vector.load %arg6[%133, %c0_27, %c0_28] : memref<6x8x128xf32, #tpu.memory_space<vmem>>, vector<1x8x128xf32>
    %135 = vector.shape_cast %134 : vector<1x8x128xf32> to vector<8x128xf32>
    %136 = vector.shape_cast %132 : vector<8x128xf32> to vector<1x8x128xf32>
    tpu.vector_store %arg6[%133, %c0_27, %c0_28], %136 {strides = array<i32>} : memref<6x8x128xf32, #tpu.memory_space<vmem>>, vector<1x8x128xf32>,
    %c3_i32 = arith.constant 3 : i32
    %137 = arith.index_cast %c3_i32 : i32 to index
    %c0_29 = arith.constant 0 : index
    %c0_30 = arith.constant 0 : index
    %138 = vector.load %arg2[%137, %c0_29, %c0_30] : memref<6x8x384xf32, #tpu.memory_space<vmem>>, vector<1x8x384xf32>
    %139 = vector.shape_cast %138 : vector<1x8x384xf32> to vector<8x384xf32>
    %cst_31 = arith.constant dense<0.000000e+00> : vector<8x384xf32>
    %140 = tpu.matmul %132, %5, %cst_31 {dimension_numbers = #tpu.dot_dimension_numbers<[1], [0], [0], [1], [0, 0, 1, 1], [], []>} : vector<8x128xf32>, vector<128x384xf32>, vector<8x384xf32> -> vector<8x384xf32>
    %141 = vector.extract_strided_slice %139 {offsets = [0, 0], sizes = [8, 128], strides = [1, 1]} : vector<8x384xf32> to vector<8x128xf32>
    %142 = vector.extract_strided_slice %140 {offsets = [0, 0], sizes = [8, 128], strides = [1, 1]} : vector<8x384xf32> to vector<8x128xf32>
    %143 = arith.addf %141, %142 : vector<8x128xf32>
    %144 = arith.negf %143 : vector<8x128xf32>
    %145 = math.exp %144 : vector<8x128xf32>
    %cst_32 = arith.constant 1.000000e+00 : f32
    %146 = vector.broadcast %cst_32 : f32 to vector<8x128xf32>
    %147 = arith.addf %146, %145 : vector<8x128xf32>
    %148 = arith.divf %146, %147 : vector<8x128xf32>
    %149 = vector.extract_strided_slice %139 {offsets = [0, 128], sizes = [8, 128], strides = [1, 1]} : vector<8x384xf32> to vector<8x128xf32>
    %150 = vector.extract_strided_slice %140 {offsets = [0, 128], sizes = [8, 128], strides = [1, 1]} : vector<8x384xf32> to vector<8x128xf32>
    %151 = arith.addf %149, %150 : vector<8x128xf32>
    %152 = arith.negf %151 : vector<8x128xf32>
    %153 = math.exp %152 : vector<8x128xf32>
    %cst_33 = arith.constant 1.000000e+00 : f32
    %154 = vector.broadcast %cst_33 : f32 to vector<8x128xf32>
    %155 = arith.addf %154, %153 : vector<8x128xf32>
    %156 = arith.divf %154, %155 : vector<8x128xf32>
    %157 = vector.extract_strided_slice %139 {offsets = [0, 256], sizes = [8, 128], strides = [1, 1]} : vector<8x384xf32> to vector<8x128xf32>
    %158 = vector.extract_strided_slice %140 {offsets = [0, 256], sizes = [8, 128], strides = [1, 1]} : vector<8x384xf32> to vector<8x128xf32>
    %159 = vector.broadcast %4 : vector<1x128xf32> to vector<8x128xf32>
    %160 = arith.addf %158, %159 : vector<8x128xf32>
    %161 = arith.mulf %148, %160 : vector<8x128xf32>
    %162 = arith.addf %157, %161 : vector<8x128xf32>
    %163 = math.tanh %162 : vector<8x128xf32>
    %164 = arith.subf %132, %163 : vector<8x128xf32>
    %165 = arith.mulf %156, %164 : vector<8x128xf32>
    %166 = arith.addf %163, %165 : vector<8x128xf32>
    %167 = arith.addi %6, %c3_i32 : i32
    %168 = vector.broadcast %167 : i32 to vector<8x1xi32>
    %169 = arith.cmpi slt, %168, %3 : vector<8x1xi32>
    %170 = vector.extract_strided_slice %132 {offsets = [0, 0], sizes = [1, 128], strides = [1, 1]} : vector<8x128xf32> to vector<1x128xf32>
    %171 = vector.shape_cast %169 : vector<8x1xi1> to vector<8x1xi1>
    %172 = vector.broadcast %171 : vector<8x1xi1> to vector<8x128xi1>
    %173 = vector.shape_cast %170 : vector<1x128xf32> to vector<1x128xf32>
    %174 = vector.broadcast %173 : vector<1x128xf32> to vector<8x128xf32>
    %175 = arith.select %172, %166, %174 : vector<8x128xi1>, vector<8x128xf32>
    %176 = arith.index_cast %c3_i32 : i32 to index
    %c0_34 = arith.constant 0 : index
    %c0_35 = arith.constant 0 : index
    %177 = vector.load %arg6[%176, %c0_34, %c0_35] : memref<6x8x128xf32, #tpu.memory_space<vmem>>, vector<1x8x128xf32>
    %178 = vector.shape_cast %177 : vector<1x8x128xf32> to vector<8x128xf32>
    %179 = vector.shape_cast %175 : vector<8x128xf32> to vector<1x8x128xf32>
    tpu.vector_store %arg6[%176, %c0_34, %c0_35], %179 {strides = array<i32>} : memref<6x8x128xf32, #tpu.memory_space<vmem>>, vector<1x8x128xf32>,
    %c4_i32 = arith.constant 4 : i32
    %180 = arith.index_cast %c4_i32 : i32 to index
    %c0_36 = arith.constant 0 : index
    %c0_37 = arith.constant 0 : index
    %181 = vector.load %arg2[%180, %c0_36, %c0_37] : memref<6x8x384xf32, #tpu.memory_space<vmem>>, vector<1x8x384xf32>
    %182 = vector.shape_cast %181 : vector<1x8x384xf32> to vector<8x384xf32>
    %cst_38 = arith.constant dense<0.000000e+00> : vector<8x384xf32>
    %183 = tpu.matmul %175, %5, %cst_38 {dimension_numbers = #tpu.dot_dimension_numbers<[1], [0], [0], [1], [0, 0, 1, 1], [], []>} : vector<8x128xf32>, vector<128x384xf32>, vector<8x384xf32> -> vector<8x384xf32>
    %184 = vector.extract_strided_slice %182 {offsets = [0, 0], sizes = [8, 128], strides = [1, 1]} : vector<8x384xf32> to vector<8x128xf32>
    %185 = vector.extract_strided_slice %183 {offsets = [0, 0], sizes = [8, 128], strides = [1, 1]} : vector<8x384xf32> to vector<8x128xf32>
    %186 = arith.addf %184, %185 : vector<8x128xf32>
    %187 = arith.negf %186 : vector<8x128xf32>
    %188 = math.exp %187 : vector<8x128xf32>
    %cst_39 = arith.constant 1.000000e+00 : f32
    %189 = vector.broadcast %cst_39 : f32 to vector<8x128xf32>
    %190 = arith.addf %189, %188 : vector<8x128xf32>
    %191 = arith.divf %189, %190 : vector<8x128xf32>
    %192 = vector.extract_strided_slice %182 {offsets = [0, 128], sizes = [8, 128], strides = [1, 1]} : vector<8x384xf32> to vector<8x128xf32>
    %193 = vector.extract_strided_slice %183 {offsets = [0, 128], sizes = [8, 128], strides = [1, 1]} : vector<8x384xf32> to vector<8x128xf32>
    %194 = arith.addf %192, %193 : vector<8x128xf32>
    %195 = arith.negf %194 : vector<8x128xf32>
    %196 = math.exp %195 : vector<8x128xf32>
    %cst_40 = arith.constant 1.000000e+00 : f32
    %197 = vector.broadcast %cst_40 : f32 to vector<8x128xf32>
    %198 = arith.addf %197, %196 : vector<8x128xf32>
    %199 = arith.divf %197, %198 : vector<8x128xf32>
    %200 = vector.extract_strided_slice %182 {offsets = [0, 256], sizes = [8, 128], strides = [1, 1]} : vector<8x384xf32> to vector<8x128xf32>
    %201 = vector.extract_strided_slice %183 {offsets = [0, 256], sizes = [8, 128], strides = [1, 1]} : vector<8x384xf32> to vector<8x128xf32>
    %202 = vector.broadcast %4 : vector<1x128xf32> to vector<8x128xf32>
    %203 = arith.addf %201, %202 : vector<8x128xf32>
    %204 = arith.mulf %191, %203 : vector<8x128xf32>
    %205 = arith.addf %200, %204 : vector<8x128xf32>
    %206 = math.tanh %205 : vector<8x128xf32>
    %207 = arith.subf %175, %206 : vector<8x128xf32>
    %208 = arith.mulf %199, %207 : vector<8x128xf32>
    %209 = arith.addf %206, %208 : vector<8x128xf32>
    %210 = arith.addi %6, %c4_i32 : i32
    %211 = vector.broadcast %210 : i32 to vector<8x1xi32>
    %212 = arith.cmpi slt, %211, %3 : vector<8x1xi32>
    %213 = vector.extract_strided_slice %175 {offsets = [0, 0], sizes = [1, 128], strides = [1, 1]} : vector<8x128xf32> to vector<1x128xf32>
    %214 = vector.shape_cast %212 : vector<8x1xi1> to vector<8x1xi1>
    %215 = vector.broadcast %214 : vector<8x1xi1> to vector<8x128xi1>
    %216 = vector.shape_cast %213 : vector<1x128xf32> to vector<1x128xf32>
    %217 = vector.broadcast %216 : vector<1x128xf32> to vector<8x128xf32>
    %218 = arith.select %215, %209, %217 : vector<8x128xi1>, vector<8x128xf32>
    %219 = arith.index_cast %c4_i32 : i32 to index
    %c0_41 = arith.constant 0 : index
    %c0_42 = arith.constant 0 : index
    %220 = vector.load %arg6[%219, %c0_41, %c0_42] : memref<6x8x128xf32, #tpu.memory_space<vmem>>, vector<1x8x128xf32>
    %221 = vector.shape_cast %220 : vector<1x8x128xf32> to vector<8x128xf32>
    %222 = vector.shape_cast %218 : vector<8x128xf32> to vector<1x8x128xf32>
    tpu.vector_store %arg6[%219, %c0_41, %c0_42], %222 {strides = array<i32>} : memref<6x8x128xf32, #tpu.memory_space<vmem>>, vector<1x8x128xf32>,
    %c5_i32 = arith.constant 5 : i32
    %223 = arith.index_cast %c5_i32 : i32 to index
    %c0_43 = arith.constant 0 : index
    %c0_44 = arith.constant 0 : index
    %224 = vector.load %arg2[%223, %c0_43, %c0_44] : memref<6x8x384xf32, #tpu.memory_space<vmem>>, vector<1x8x384xf32>
    %225 = vector.shape_cast %224 : vector<1x8x384xf32> to vector<8x384xf32>
    %cst_45 = arith.constant dense<0.000000e+00> : vector<8x384xf32>
    %226 = tpu.matmul %218, %5, %cst_45 {dimension_numbers = #tpu.dot_dimension_numbers<[1], [0], [0], [1], [0, 0, 1, 1], [], []>} : vector<8x128xf32>, vector<128x384xf32>, vector<8x384xf32> -> vector<8x384xf32>
    %227 = vector.extract_strided_slice %225 {offsets = [0, 0], sizes = [8, 128], strides = [1, 1]} : vector<8x384xf32> to vector<8x128xf32>
    %228 = vector.extract_strided_slice %226 {offsets = [0, 0], sizes = [8, 128], strides = [1, 1]} : vector<8x384xf32> to vector<8x128xf32>
    %229 = arith.addf %227, %228 : vector<8x128xf32>
    %230 = arith.negf %229 : vector<8x128xf32>
    %231 = math.exp %230 : vector<8x128xf32>
    %cst_46 = arith.constant 1.000000e+00 : f32
    %232 = vector.broadcast %cst_46 : f32 to vector<8x128xf32>
    %233 = arith.addf %232, %231 : vector<8x128xf32>
    %234 = arith.divf %232, %233 : vector<8x128xf32>
    %235 = vector.extract_strided_slice %225 {offsets = [0, 128], sizes = [8, 128], strides = [1, 1]} : vector<8x384xf32> to vector<8x128xf32>
    %236 = vector.extract_strided_slice %226 {offsets = [0, 128], sizes = [8, 128], strides = [1, 1]} : vector<8x384xf32> to vector<8x128xf32>
    %237 = arith.addf %235, %236 : vector<8x128xf32>
    %238 = arith.negf %237 : vector<8x128xf32>
    %239 = math.exp %238 : vector<8x128xf32>
    %cst_47 = arith.constant 1.000000e+00 : f32
    %240 = vector.broadcast %cst_47 : f32 to vector<8x128xf32>
    %241 = arith.addf %240, %239 : vector<8x128xf32>
    %242 = arith.divf %240, %241 : vector<8x128xf32>
    %243 = vector.extract_strided_slice %225 {offsets = [0, 256], sizes = [8, 128], strides = [1, 1]} : vector<8x384xf32> to vector<8x128xf32>
    %244 = vector.extract_strided_slice %226 {offsets = [0, 256], sizes = [8, 128], strides = [1, 1]} : vector<8x384xf32> to vector<8x128xf32>
    %245 = vector.broadcast %4 : vector<1x128xf32> to vector<8x128xf32>
    %246 = arith.addf %244, %245 : vector<8x128xf32>
    %247 = arith.mulf %234, %246 : vector<8x128xf32>
    %248 = arith.addf %243, %247 : vector<8x128xf32>
    %249 = math.tanh %248 : vector<8x128xf32>
    %250 = arith.subf %218, %249 : vector<8x128xf32>
    %251 = arith.mulf %242, %250 : vector<8x128xf32>
    %252 = arith.addf %249, %251 : vector<8x128xf32>
    %253 = arith.addi %6, %c5_i32 : i32
    %254 = vector.broadcast %253 : i32 to vector<8x1xi32>
    %255 = arith.cmpi slt, %254, %3 : vector<8x1xi32>
    %256 = vector.extract_strided_slice %218 {offsets = [0, 0], sizes = [1, 128], strides = [1, 1]} : vector<8x128xf32> to vector<1x128xf32>
    %257 = vector.shape_cast %255 : vector<8x1xi1> to vector<8x1xi1>
    %258 = vector.broadcast %257 : vector<8x1xi1> to vector<8x128xi1>
    %259 = vector.shape_cast %256 : vector<1x128xf32> to vector<1x128xf32>
    %260 = vector.broadcast %259 : vector<1x128xf32> to vector<8x128xf32>
    %261 = arith.select %258, %252, %260 : vector<8x128xi1>, vector<8x128xf32>
    %262 = arith.index_cast %c5_i32 : i32 to index
    %c0_48 = arith.constant 0 : index
    %c0_49 = arith.constant 0 : index
    %263 = vector.load %arg6[%262, %c0_48, %c0_49] : memref<6x8x128xf32, #tpu.memory_space<vmem>>, vector<1x8x128xf32>
    %264 = vector.shape_cast %263 : vector<1x8x128xf32> to vector<8x128xf32>
    %265 = vector.shape_cast %261 : vector<8x128xf32> to vector<1x8x128xf32>
    tpu.vector_store %arg6[%262, %c0_48, %c0_49], %265 {strides = array<i32>} : memref<6x8x128xf32, #tpu.memory_space<vmem>>, vector<1x8x128xf32>,
    %c6_i32_50 = arith.constant 6 : i32
    %c0_51 = arith.constant 0 : index
    %c0_52 = arith.constant 0 : index
    %266 = vector.load %arg7[%c0_51, %c0_52] : memref<8x128xf32, #tpu.memory_space<vmem>>, vector<8x128xf32>
    tpu.vector_store %arg7[%c0_51, %c0_52], %261 {strides = array<i32>} : memref<8x128xf32, #tpu.memory_space<vmem>>, vector<8x128xf32>,
    return
  }
  func.func @transform_0(%arg0: i32) -> (i32, i32) {
    %c0_i32 = arith.constant 0 : i32
    %c0_i32_0 = arith.constant 0 : i32
    %c0_i32_1 = arith.constant 0 : i32
    return %c0_i32, %c0_i32_0 : i32, i32
  }
  func.func @transform_1(%arg0: i32) -> (i32, i32, i32) {
    %c0_i32 = arith.constant 0 : i32
    %c0_i32_0 = arith.constant 0 : i32
    %c0_i32_1 = arith.constant 0 : i32
    return %arg0, %c0_i32, %c0_i32_0 : i32, i32, i32
  }
  func.func @transform_2(%arg0: i32) -> (i32, i32) {
    %c0_i32 = arith.constant 0 : i32
    %c0_i32_0 = arith.constant 0 : i32
    %c0_i32_1 = arith.constant 0 : i32
    return %c0_i32, %c0_i32_0 : i32, i32
  }
  func.func @transform_3(%arg0: i32) -> (i32, i32) {
    %c0_i32 = arith.constant 0 : i32
    %c0_i32_0 = arith.constant 0 : i32
    %c0_i32_1 = arith.constant 0 : i32
    return %c0_i32, %c0_i32_0 : i32, i32
  }
  func.func @transform_4(%arg0: i32) -> (i32, i32) {
    %c0_i32 = arith.constant 0 : i32
    %c0_i32_0 = arith.constant 0 : i32
    %c0_i32_1 = arith.constant 0 : i32
    return %c0_i32, %c0_i32_0 : i32, i32
  }
  func.func @transform_5(%arg0: i32) -> (i32, i32, i32) {
    %c0_i32 = arith.constant 0 : i32
    %c0_i32_0 = arith.constant 0 : i32
    %c0_i32_1 = arith.constant 0 : i32
    return %arg0, %c0_i32, %c0_i32_0 : i32, i32, i32
  }
}

</mosaic_0001>

<llo_original>
// kernel: custom_gru_forward.2
$region0: #{custom_gru_forward.2}
  #allocation0 [shape = 'u32[]', space=smem, size = 0x4, offset = 0x4, fixed_abs, tag = 'smem constant byte address 0x4 - core index']
  #allocation1 [shape = 'u32[72,128]{1,0:T(1,128)}', space=vmem, size = 0x9000, scoped, tag = 'internal scratch']
  #allocation2 [shape = 'f32[8,128]{1,0:T(8,128)}', space=vmem, size = 0x1000, scoped, tag = 'scratch operand']
  %s0 = inlined_call_operand.vmem [shape: s32[8,1], index: 0, kind: input, shape index: {}]
  %s1 = inlined_call_operand.vmem [shape: f32[6,8,384], index: 1, kind: input, shape index: {}]
  %s2 = inlined_call_operand.vmem [shape: f32[8,128], index: 2, kind: input, shape index: {}]
  %s3 = inlined_call_operand.vmem [shape: f32[1,128], index: 3, kind: input, shape index: {}]
  %s4 = inlined_call_operand.vmem [shape: f32[128,384], index: 4, kind: input, shape index: {}]
  %s5 = inlined_call_operand.vmem [shape: f32[6,8,128], index: 5, kind: output, shape index: {}]
  %s6 = sld [smem:[#allocation0]]
  $region34: #{custom_gru_forward.2} parent=0
    _
  %s8 = ssub.s32 1, %s6
  %s9 = scalar_select 0, %s8, %s6
  // Predicated region
  $region2: #{custom_gru_forward.2} parent=0 // pred_check
    _
  $region3: #{custom_gru_forward.2} parent=0 // pred_check_branch
    %11 = sbr.rel (0) target = $region5
  $region4: #{custom_gru_forward.2} parent=0 // pred_region
    _
  $region5: #{custom_gru_forward.2} parent=0 // pred_fallthru
    _
  // Predicated region
  $region6: #{custom_gru_forward.2} parent=0 // pred_check
    _
  $region7: #{custom_gru_forward.2} parent=0 // pred_check_branch
    %13 = sbr.rel (0) target = $region9
  $region8: #{custom_gru_forward.2} parent=0 // pred_region
    _
  $region9: #{custom_gru_forward.2} parent=0 // pred_fallthru
    _
  // Predicated region
  $region10: #{custom_gru_forward.2} parent=0 // pred_check
    _
  $region11: #{custom_gru_forward.2} parent=0 // pred_check_branch
    %15 = sbr.rel (0) target = $region13
  $region12: #{custom_gru_forward.2} parent=0 // pred_region
    _
  $region13: #{custom_gru_forward.2} parent=0 // pred_fallthru
    _
  // Predicated region
  $region14: #{custom_gru_forward.2} parent=0 // pred_check
    _
  $region15: #{custom_gru_forward.2} parent=0 // pred_check_branch
    %17 = sbr.rel (0) target = $region17
  $region16: #{custom_gru_forward.2} parent=0 // pred_region
    _
  $region17: #{custom_gru_forward.2} parent=0 // pred_fallthru
    _
  // Predicated region
  $region18: #{custom_gru_forward.2} parent=0 // pred_check
    _
  $region19: #{custom_gru_forward.2} parent=0 // pred_check_branch
    %19 = sbr.rel (0) target = $region21
  $region20: #{custom_gru_forward.2} parent=0 // pred_region
    _
  $region21: #{custom_gru_forward.2} parent=0 // pred_fallthru
    _
  %p20 = scmp.eq.s32.totalorder 0, 0
  // Predicated region
  $region22: #{custom_gru_forward.2} parent=0 // pred_check
    %p21 = pneg %p20
  $region23: #{custom_gru_forward.2} parent=0 // pred_check_branch
    %23 = sbr.rel (%p21) target = $region25
  $region24: #{custom_gru_forward.2} parent=0 // pred_region
    %v24 = vld [vmem:[%s2] sm:$0xff]
    %25 = vst [vmem:[#allocation2] sm:$0xff] %v24
  $region25: #{custom_gru_forward.2} parent=0 // pred_fallthru
    _
  %v26 = vld [vmem:[%s0] sm:$0xff]
  %v27 = vld [vmem:[%s3] sm:$0x1]
  %v28 = vld [vmem:[%s4] sm:$0xff]
  %v29 = vld [vmem:[%s4 + $0x8] sm:$0xff]
  %v30 = vld [vmem:[%s4 + $0x10] sm:$0xff]
  %v31 = vld [vmem:[%s4 + $0x18] sm:$0xff]
  %v32 = vld [vmem:[%s4 + $0x20] sm:$0xff]
  %v33 = vld [vmem:[%s4 + $0x28] sm:$0xff]
  %v34 = vld [vmem:[%s4 + $0x30] sm:$0xff]
  %v35 = vld [vmem:[%s4 + $0x38] sm:$0xff]
  %v36 = vld [vmem:[%s4 + $0x40] sm:$0xff]
  %v37 = vld [vmem:[%s4 + $0x48] sm:$0xff]
  %v38 = vld [vmem:[%s4 + $0x50] sm:$0xff]
  %v39 = vld [vmem:[%s4 + $0x58] sm:$0xff]
  %v40 = vld [vmem:[%s4 + $0x60] sm:$0xff]
  %v41 = vld [vmem:[%s4 + $0x68] sm:$0xff]
  %v42 = vld [vmem:[%s4 + $0x70] sm:$0xff]
  %v43 = vld [vmem:[%s4 + $0x78] sm:$0xff]
  %v44 = vld [vmem:[%s4 + $0x80] sm:$0xff]
  %v45 = vld [vmem:[%s4 + $0x88] sm:$0xff]
  %v46 = vld [vmem:[%s4 + $0x90] sm:$0xff]
  %v47 = vld [vmem:[%s4 + $0x98] sm:$0xff]
  %v48 = vld [vmem:[%s4 + $0xa0] sm:$0xff]
  %v49 = vld [vmem:[%s4 + $0xa8] sm:$0xff]
  %v50 = vld [vmem:[%s4 + $0xb0] sm:$0xff]
  %v51 = vld [vmem:[%s4 + $0xb8] sm:$0xff]
  %v52 = vld [vmem:[%s4 + $0xc0] sm:$0xff]
  %v53 = vld [vmem:[%s4 + $0xc8] sm:$0xff]
  %v54 = vld [vmem:[%s4 + $0xd0] sm:$0xff]
  %v55 = vld [vmem:[%s4 + $0xd8] sm:$0xff]
  %v56 = vld [vmem:[%s4 + $0xe0] sm:$0xff]
  %v57 = vld [vmem:[%s4 + $0xe8] sm:$0xff]
  %v58 = vld [vmem:[%s4 + $0xf0] sm:$0xff]
  %v59 = vld [vmem:[%s4 + $0xf8] sm:$0xff]
  %v60 = vld [vmem:[%s4 + $0x100] sm:$0xff]
  %v61 = vld [vmem:[%s4 + $0x108] sm:$0xff]
  %v62 = vld [vmem:[%s4 + $0x110] sm:$0xff]
  %v63 = vld [vmem:[%s4 + $0x118] sm:$0xff]
  %v64 = vld [vmem:[%s4 + $0x120] sm:$0xff]
  %v65 = vld [vmem:[%s4 + $0x128] sm:$0xff]
  %v66 = vld [vmem:[%s4 + $0x130] sm:$0xff]
  %v67 = vld [vmem:[%s4 + $0x138] sm:$0xff]
  %v68 = vld [vmem:[%s4 + $0x140] sm:$0xff]
  %v69 = vld [vmem:[%s4 + $0x148] sm:$0xff]
  %v70 = vld [vmem:[%s4 + $0x150] sm:$0xff]
  %v71 = vld [vmem:[%s4 + $0x158] sm:$0xff]
  %v72 = vld [vmem:[%s4 + $0x160] sm:$0xff]
  %v73 = vld [vmem:[%s4 + $0x168] sm:$0xff]
  %v74 = vld [vmem:[%s4 + $0x170] sm:$0xff]
  %v75 = vld [vmem:[%s4 + $0x178] sm:$0xff]
  %s76 = smul.u32 0, 6
  %v77 = vld [vmem:[#allocation2] sm:$0xff]
  %v78 = vld [vmem:[%s1] sm:$0xff]
  %v79 = vld [vmem:[%s1 + $0x8] sm:$0xff]
  %v80 = vld [vmem:[%s1 + $0x10] sm:$0xff]
  %81 = vmatpush.msra.mxu0 %v73
  %82 = vmatpush.msra.mxu0 %v70
  %83 = vmatpush.msra.mxu0 %v67
  %84 = vmatpush.msra.mxu0 %v64
  %85 = vmatpush.msra.mxu0 %v61
  %86 = vmatpush.msra.mxu0 %v58
  %87 = vmatpush.msra.mxu0 %v55
  %88 = vmatpush.msra.mxu0 %v52
  %89 = vmatpush.msra.mxu0 %v49
  %90 = vmatpush.msra.mxu0 %v46
  %91 = vmatpush.msra.mxu0 %v43
  %92 = vmatpush.msra.mxu0 %v40
  %93 = vmatpush.msra.mxu0 %v37
  %94 = vmatpush.msra.mxu0 %v34
  %95 = vmatpush.msra.mxu0 %v31
  %96 = vmatpush.msra.mxu0 %v28
  %97 = vmatmul.f32.gmra.mxu0 %v77
  %v98 = vpop.f32.mrf.mxu0
  %v99 = vadd.f32 0.0, %v98
  %100 = vdwg.mxu0
  %101 = vmatpush.msra.mxu0 %v74
  %102 = vmatpush.msra.mxu0 %v71
  %103 = vmatpush.msra.mxu0 %v68
  %104 = vmatpush.msra.mxu0 %v65
  %105 = vmatpush.msra.mxu0 %v62
  %106 = vmatpush.msra.mxu0 %v59
  %107 = vmatpush.msra.mxu0 %v56
  %108 = vmatpush.msra.mxu0 %v53
  %109 = vmatpush.msra.mxu0 %v50
  %110 = vmatpush.msra.mxu0 %v47
  %111 = vmatpush.msra.mxu0 %v44
  %112 = vmatpush.msra.mxu0 %v41
  %113 = vmatpush.msra.mxu0 %v38
  %114 = vmatpush.msra.mxu0 %v35
  %115 = vmatpush.msra.mxu0 %v32
  %116 = vmatpush.msra.mxu0 %v29
  %117 = vmatmul.f32.gmra.mxu0 %v77
  %v118 = vpop.f32.mrf.mxu0
  %v119 = vadd.f32 0.0, %v118
  %120 = vdwg.mxu0
  %121 = vmatpush.msra.mxu0 %v75
  %122 = vmatpush.msra.mxu0 %v72
  %123 = vmatpush.msra.mxu0 %v69
  %124 = vmatpush.msra.mxu0 %v66
  %125 = vmatpush.msra.mxu0 %v63
  %126 = vmatpush.msra.mxu0 %v60
  %127 = vmatpush.msra.mxu0 %v57
  %128 = vmatpush.msra.mxu0 %v54
  %129 = vmatpush.msra.mxu0 %v51
  %130 = vmatpush.msra.mxu0 %v48
  %131 = vmatpush.msra.mxu0 %v45
  %132 = vmatpush.msra.mxu0 %v42
  %133 = vmatpush.msra.mxu0 %v39
  %134 = vmatpush.msra.mxu0 %v36
  %135 = vmatpush.msra.mxu0 %v33
  %136 = vmatpush.msra.mxu0 %v30
  %137 = vmatmul.f32.gmra.mxu0 %v77
  %v138 = vpop.f32.mrf.mxu0
  %v139 = vadd.f32 0.0, %v138
  %140 = vdwg.mxu0
  %v141 = vadd.f32 %v78, %v99
  %v142 = vxor.u32 %v141, 2147483648
  %v143 = vmul.f32 %v142, 1.442695
  %v144 = vpow.pop %v143
  %v145 = vadd.f32 %v144, 1.0
  %v146 = vrcp.pop %v145
  %v147 = vmul.f32 %v145, %v146
  %v148 = vsub.f32 1.0, %v147
  %v149 = vmul.f32 %v146, %v148
  %v150 = vadd.f32 %v146, %v149
  %vm151 = vweird.f32 %v145
  %vm152 = vweird.f32 %v146
  %vm153 = vmor %vm151, %vm152
  %v154 = vsel %vm153, %v146, %v150
  %v155 = vand.u32 2147483647, %v145
  %vm156 = vcmp.eq.f32.partialorder %v155, 8.507059e+37
  %v157 = vand.u32 %v145, 2147483648
  %v158 = vor.u32 1.1754944e-38, %v157
  %v159 = vsel %vm156, %v158, %v154
  %v160 = vmul.f32 1.0, %v159
  %v161 = vadd.f32 %v79, %v119
  %v162 = vxor.u32 %v161, 2147483648
  %v163 = vmul.f32 %v162, 1.442695
  %v164 = vpow.pop %v163
  %v165 = vadd.f32 %v164, 1.0
  %v166 = vrcp.pop %v165
  %v167 = vmul.f32 %v165, %v166
  %v168 = vsub.f32 1.0, %v167
  %v169 = vmul.f32 %v166, %v168
  %v170 = vadd.f32 %v166, %v169
  %vm171 = vweird.f32 %v165
  %vm172 = vweird.f32 %v166
  %vm173 = vmor %vm171, %vm172
  %v174 = vsel %vm173, %v166, %v170
  %v175 = vand.u32 2147483647, %v165
  %vm176 = vcmp.eq.f32.partialorder %v175, 8.507059e+37
  %v177 = vand.u32 %v165, 2147483648
  %v178 = vor.u32 1.1754944e-38, %v177
  %v179 = vsel %vm176, %v178, %v174
  %v180 = vmul.f32 1.0, %v179
  %v182 = vperm.slane %v27, 0
  %v184 = vadd.f32 %v139, %v182
  %v185 = vmul.f32 %v160, %v184
  %v186 = vadd.f32 %v80, %v185
  %v187 = vtanh.pop %v186
  %v188 = vsub.f32 %v77, %v187
  %v189 = vmul.f32 %v180, %v188
  %v190 = vadd.f32 %v187, %v189
  %v191 = vstv %s76
  %vm192 = vcmp.lt.s32.totalorder %v191, %v26
  %v193 = vsel %vm192, 1, 0
  %194 = vset.pattern.permute.xlu0 0
  %195 = vperm.xlu0 %194, %v193
  %v196 = vpop.permute.xlu0 %195
  %vm197 = vcmp.eq.s32.totalorder %v196, 1
  %v198 = vperm.slane %v77, 0
  %v199 = vsel %vm197, %v190, %v198
  %200 = vst [vmem:[%s5] sm:$0xff] %v199
  %s201 = scalar_lea.vmem %s1, 24
  %v202 = vld [vmem:[%s201] sm:$0xff]
  %v203 = vld [vmem:[%s201 + $0x8] sm:$0xff]
  %v204 = vld [vmem:[%s201 + $0x10] sm:$0xff]
  %205 = vmatpush.msra.mxu0 %v73
  %206 = vmatpush.msra.mxu0 %v70
  %207 = vmatpush.msra.mxu0 %v67
  %208 = vmatpush.msra.mxu0 %v64
  %209 = vmatpush.msra.mxu0 %v61
  %210 = vmatpush.msra.mxu0 %v58
  %211 = vmatpush.msra.mxu0 %v55
  %212 = vmatpush.msra.mxu0 %v52
  %213 = vmatpush.msra.mxu0 %v49
  %214 = vmatpush.msra.mxu0 %v46
  %215 = vmatpush.msra.mxu0 %v43
  %216 = vmatpush.msra.mxu0 %v40
  %217 = vmatpush.msra.mxu0 %v37
  %218 = vmatpush.msra.mxu0 %v34
  %219 = vmatpush.msra.mxu0 %v31
  %220 = vmatpush.msra.mxu0 %v28
  %221 = vmatmul.f32.gmra.mxu0 %v199
  %v222 = vpop.f32.mrf.mxu0
  %v223 = vadd.f32 0.0, %v222
  %224 = vdwg.mxu0
  %225 = vmatpush.msra.mxu0 %v74
  %226 = vmatpush.msra.mxu0 %v71
  %227 = vmatpush.msra.mxu0 %v68
  %228 = vmatpush.msra.mxu0 %v65
  %229 = vmatpush.msra.mxu0 %v62
  %230 = vmatpush.msra.mxu0 %v59
  %231 = vmatpush.msra.mxu0 %v56
  %232 = vmatpush.msra.mxu0 %v53
  %233 = vmatpush.msra.mxu0 %v50
  %234 = vmatpush.msra.mxu0 %v47
  %235 = vmatpush.msra.mxu0 %v44
  %236 = vmatpush.msra.mxu0 %v41
  %237 = vmatpush.msra.mxu0 %v38
  %238 = vmatpush.msra.mxu0 %v35
  %239 = vmatpush.msra.mxu0 %v32
  %240 = vmatpush.msra.mxu0 %v29
  %241 = vmatmul.f32.gmra.mxu0 %v199
  %v242 = vpop.f32.mrf.mxu0
  %v243 = vadd.f32 0.0, %v242
  %244 = vdwg.mxu0
  %245 = vmatpush.msra.mxu0 %v75
  %246 = vmatpush.msra.mxu0 %v72
  %247 = vmatpush.msra.mxu0 %v69
  %248 = vmatpush.msra.mxu0 %v66
  %249 = vmatpush.msra.mxu0 %v63
  %250 = vmatpush.msra.mxu0 %v60
  %251 = vmatpush.msra.mxu0 %v57
  %252 = vmatpush.msra.mxu0 %v54
  %253 = vmatpush.msra.mxu0 %v51
  %254 = vmatpush.msra.mxu0 %v48
  %255 = vmatpush.msra.mxu0 %v45
  %256 = vmatpush.msra.mxu0 %v42
  %257 = vmatpush.msra.mxu0 %v39
  %258 = vmatpush.msra.mxu0 %v36
  %259 = vmatpush.msra.mxu0 %v33
  %260 = vmatpush.msra.mxu0 %v30
  %261 = vmatmul.f32.gmra.mxu0 %v199
  %v262 = vpop.f32.mrf.mxu0
  %v263 = vadd.f32 0.0, %v262
  %264 = vdwg.mxu0
  %v265 = vadd.f32 %v202, %v223
  %v266 = vxor.u32 %v265, 2147483648
  %v267 = vmul.f32 %v266, 1.442695
  %v268 = vpow.pop %v267
  %v269 = vadd.f32 %v268, 1.0
  %v270 = vrcp.pop %v269
  %v271 = vmul.f32 %v269, %v270
  %v272 = vsub.f32 1.0, %v271
  %v273 = vmul.f32 %v270, %v272
  %v274 = vadd.f32 %v270, %v273
  %vm275 = vweird.f32 %v269
  %vm276 = vweird.f32 %v270
  %vm277 = vmor %vm275, %vm276
  %v278 = vsel %vm277, %v270, %v274
  %v279 = vand.u32 2147483647, %v269
  %vm280 = vcmp.eq.f32.partialorder %v279, 8.507059e+37
  %v281 = vand.u32 %v269, 2147483648
  %v282 = vor.u32 1.1754944e-38, %v281
  %v283 = vsel %vm280, %v282, %v278
  %v284 = vmul.f32 1.0, %v283
  %v285 = vadd.f32 %v203, %v243
  %v286 = vxor.u32 %v285, 2147483648
  %v287 = vmul.f32 %v286, 1.442695
  %v288 = vpow.pop %v287
  %v289 = vadd.f32 %v288, 1.0
  %v290 = vrcp.pop %v289
  %v291 = vmul.f32 %v289, %v290
  %v292 = vsub.f32 1.0, %v291
  %v293 = vmul.f32 %v290, %v292
  %v294 = vadd.f32 %v290, %v293
  %vm295 = vweird.f32 %v289
  %vm296 = vweird.f32 %v290
  %vm297 = vmor %vm295, %vm296
  %v298 = vsel %vm297, %v290, %v294
  %v299 = vand.u32 2147483647, %v289
  %vm300 = vcmp.eq.f32.partialorder %v299, 8.507059e+37
  %v301 = vand.u32 %v289, 2147483648
  %v302 = vor.u32 1.1754944e-38, %v301
  %v303 = vsel %vm300, %v302, %v298
  %v304 = vmul.f32 1.0, %v303
  %v305 = vadd.f32 %v263, %v182
  %v306 = vmul.f32 %v284, %v305
  %v307 = vadd.f32 %v204, %v306
  %v308 = vtanh.pop %v307
  %v309 = vsub.f32 %v199, %v308
  %v310 = vmul.f32 %v304, %v309
  %v311 = vadd.f32 %v308, %v310
  %s312 = sadd.s32 %s76, 1
  %v313 = vstv %s312
  %vm314 = vcmp.lt.s32.totalorder %v313, %v26
  %v315 = vsel %vm314, 1, 0
  %316 = vset.pattern.permute.xlu0 0
  %317 = vperm.xlu0 %316, %v315
  %v318 = vpop.permute.xlu0 %317
  %vm319 = vcmp.eq.s32.totalorder %v318, 1
  %v320 = vperm.slane %v199, 0
  %v321 = vsel %vm319, %v311, %v320
  %s322 = scalar_lea.vmem %s5, 8
  %323 = vst [vmem:[%s322] sm:$0xff] %v321
  %s324 = scalar_lea.vmem %s1, 48
  %v325 = vld [vmem:[%s324] sm:$0xff]
  %v326 = vld [vmem:[%s324 + $0x8] sm:$0xff]
  %v327 = vld [vmem:[%s324 + $0x10] sm:$0xff]
  %328 = vmatpush.msra.mxu0 %v73
  %329 = vmatpush.msra.mxu0 %v70
  %330 = vmatpush.msra.mxu0 %v67
  %331 = vmatpush.msra.mxu0 %v64
  %332 = vmatpush.msra.mxu0 %v61
  %333 = vmatpush.msra.mxu0 %v58
  %334 = vmatpush.msra.mxu0 %v55
  %335 = vmatpush.msra.mxu0 %v52
  %336 = vmatpush.msra.mxu0 %v49
  %337 = vmatpush.msra.mxu0 %v46
  %338 = vmatpush.msra.mxu0 %v43
  %339 = vmatpush.msra.mxu0 %v40
  %340 = vmatpush.msra.mxu0 %v37
  %341 = vmatpush.msra.mxu0 %v34
  %342 = vmatpush.msra.mxu0 %v31
  %343 = vmatpush.msra.mxu0 %v28
  %344 = vmatmul.f32.gmra.mxu0 %v321
  %v345 = vpop.f32.mrf.mxu0
  %v346 = vadd.f32 0.0, %v345
  %347 = vdwg.mxu0
  %348 = vmatpush.msra.mxu0 %v74
  %349 = vmatpush.msra.mxu0 %v71
  %350 = vmatpush.msra.mxu0 %v68
  %351 = vmatpush.msra.mxu0 %v65
  %352 = vmatpush.msra.mxu0 %v62
  %353 = vmatpush.msra.mxu0 %v59
  %354 = vmatpush.msra.mxu0 %v56
  %355 = vmatpush.msra.mxu0 %v53
  %356 = vmatpush.msra.mxu0 %v50
  %357 = vmatpush.msra.mxu0 %v47
  %358 = vmatpush.msra.mxu0 %v44
  %359 = vmatpush.msra.mxu0 %v41
  %360 = vmatpush.msra.mxu0 %v38
  %361 = vmatpush.msra.mxu0 %v35
  %362 = vmatpush.msra.mxu0 %v32
  %363 = vmatpush.msra.mxu0 %v29
  %364 = vmatmul.f32.gmra.mxu0 %v321
  %v365 = vpop.f32.mrf.mxu0
  %v366 = vadd.f32 0.0, %v365
  %367 = vdwg.mxu0
  %368 = vmatpush.msra.mxu0 %v75
  %369 = vmatpush.msra.mxu0 %v72
  %370 = vmatpush.msra.mxu0 %v69
  %371 = vmatpush.msra.mxu0 %v66
  %372 = vmatpush.msra.mxu0 %v63
  %373 = vmatpush.msra.mxu0 %v60
  %374 = vmatpush.msra.mxu0 %v57
  %375 = vmatpush.msra.mxu0 %v54
  %376 = vmatpush.msra.mxu0 %v51
  %377 = vmatpush.msra.mxu0 %v48
  %378 = vmatpush.msra.mxu0 %v45
  %379 = vmatpush.msra.mxu0 %v42
  %380 = vmatpush.msra.mxu0 %v39
  %381 = vmatpush.msra.mxu0 %v36
  %382 = vmatpush.msra.mxu0 %v33
  %383 = vmatpush.msra.mxu0 %v30
  %384 = vmatmul.f32.gmra.mxu0 %v321
  %v385 = vpop.f32.mrf.mxu0
  %v386 = vadd.f32 0.0, %v385
  %387 = vdwg.mxu0
  %v388 = vadd.f32 %v325, %v346
  %v389 = vxor.u32 %v388, 2147483648
  %v390 = vmul.f32 %v389, 1.442695
  %v391 = vpow.pop %v390
  %v392 = vadd.f32 %v391, 1.0
  %v393 = vrcp.pop %v392
  %v394 = vmul.f32 %v392, %v393
  %v395 = vsub.f32 1.0, %v394
  %v396 = vmul.f32 %v393, %v395
  %v397 = vadd.f32 %v393, %v396
  %vm398 = vweird.f32 %v392
  %vm399 = vweird.f32 %v393
  %vm400 = vmor %vm398, %vm399
  %v401 = vsel %vm400, %v393, %v397
  %v402 = vand.u32 2147483647, %v392
  %vm403 = vcmp.eq.f32.partialorder %v402, 8.507059e+37
  %v404 = vand.u32 %v392, 2147483648
  %v405 = vor.u32 1.1754944e-38, %v404
  %v406 = vsel %vm403, %v405, %v401
  %v407 = vmul.f32 1.0, %v406
  %v408 = vadd.f32 %v326, %v366
  %v409 = vxor.u32 %v408, 2147483648
  %v410 = vmul.f32 %v409, 1.442695
  %v411 = vpow.pop %v410
  %v412 = vadd.f32 %v411, 1.0
  %v413 = vrcp.pop %v412
  %v414 = vmul.f32 %v412, %v413
  %v415 = vsub.f32 1.0, %v414
  %v416 = vmul.f32 %v413, %v415
  %v417 = vadd.f32 %v413, %v416
  %vm418 = vweird.f32 %v412
  %vm419 = vweird.f32 %v413
  %vm420 = vmor %vm418, %vm419
  %v421 = vsel %vm420, %v413, %v417
  %v422 = vand.u32 2147483647, %v412
  %vm423 = vcmp.eq.f32.partialorder %v422, 8.507059e+37
  %v424 = vand.u32 %v412, 2147483648
  %v425 = vor.u32 1.1754944e-38, %v424
  %v426 = vsel %vm423, %v425, %v421
  %v427 = vmul.f32 1.0, %v426
  %v428 = vadd.f32 %v386, %v182
  %v429 = vmul.f32 %v407, %v428
  %v430 = vadd.f32 %v327, %v429
  %v431 = vtanh.pop %v430
  %v432 = vsub.f32 %v321, %v431
  %v433 = vmul.f32 %v427, %v432
  %v434 = vadd.f32 %v431, %v433
  %s435 = sadd.s32 %s76, 2
  %v436 = vstv %s435
  %vm437 = vcmp.lt.s32.totalorder %v436, %v26
  %v438 = vsel %vm437, 1, 0
  %439 = vset.pattern.permute.xlu0 0
  %440 = vperm.xlu0 %439, %v438
  %v441 = vpop.permute.xlu0 %440
  %vm442 = vcmp.eq.s32.totalorder %v441, 1
  %v443 = vperm.slane %v321, 0
  %v444 = vsel %vm442, %v434, %v443
  %s445 = scalar_lea.vmem %s5, 16
  %446 = vst [vmem:[%s445] sm:$0xff] %v444
  %s447 = scalar_lea.vmem %s1, 72
  %v448 = vld [vmem:[%s447] sm:$0xff]
  %v449 = vld [vmem:[%s447 + $0x8] sm:$0xff]
  %v450 = vld [vmem:[%s447 + $0x10] sm:$0xff]
  %451 = vmatpush.msra.mxu0 %v73
  %452 = vmatpush.msra.mxu0 %v70
  %453 = vmatpush.msra.mxu0 %v67
  %454 = vmatpush.msra.mxu0 %v64
  %455 = vmatpush.msra.mxu0 %v61
  %456 = vmatpush.msra.mxu0 %v58
  %457 = vmatpush.msra.mxu0 %v55
  %458 = vmatpush.msra.mxu0 %v52
  %459 = vmatpush.msra.mxu0 %v49
  %460 = vmatpush.msra.mxu0 %v46
  %461 = vmatpush.msra.mxu0 %v43
  %462 = vmatpush.msra.mxu0 %v40
  %463 = vmatpush.msra.mxu0 %v37
  %464 = vmatpush.msra.mxu0 %v34
  %465 = vmatpush.msra.mxu0 %v31
  %466 = vmatpush.msra.mxu0 %v28
  %467 = vmatmul.f32.gmra.mxu0 %v444
  %v468 = vpop.f32.mrf.mxu0
  %v469 = vadd.f32 0.0, %v468
  %470 = vdwg.mxu0
  %471 = vmatpush.msra.mxu0 %v74
  %472 = vmatpush.msra.mxu0 %v71
  %473 = vmatpush.msra.mxu0 %v68
  %474 = vmatpush.msra.mxu0 %v65
  %475 = vmatpush.msra.mxu0 %v62
  %476 = vmatpush.msra.mxu0 %v59
  %477 = vmatpush.msra.mxu0 %v56
  %478 = vmatpush.msra.mxu0 %v53
  %479 = vmatpush.msra.mxu0 %v50
  %480 = vmatpush.msra.mxu0 %v47
  %481 = vmatpush.msra.mxu0 %v44
  %482 = vmatpush.msra.mxu0 %v41
  %483 = vmatpush.msra.mxu0 %v38
  %484 = vmatpush.msra.mxu0 %v35
  %485 = vmatpush.msra.mxu0 %v32
  %486 = vmatpush.msra.mxu0 %v29
  %487 = vmatmul.f32.gmra.mxu0 %v444
  %v488 = vpop.f32.mrf.mxu0
  %v489 = vadd.f32 0.0, %v488
  %490 = vdwg.mxu0
  %491 = vmatpush.msra.mxu0 %v75
  %492 = vmatpush.msra.mxu0 %v72
  %493 = vmatpush.msra.mxu0 %v69
  %494 = vmatpush.msra.mxu0 %v66
  %495 = vmatpush.msra.mxu0 %v63
  %496 = vmatpush.msra.mxu0 %v60
  %497 = vmatpush.msra.mxu0 %v57
  %498 = vmatpush.msra.mxu0 %v54
  %499 = vmatpush.msra.mxu0 %v51
  %500 = vmatpush.msra.mxu0 %v48
  %501 = vmatpush.msra.mxu0 %v45
  %502 = vmatpush.msra.mxu0 %v42
  %503 = vmatpush.msra.mxu0 %v39
  %504 = vmatpush.msra.mxu0 %v36
  %505 = vmatpush.msra.mxu0 %v33
  %506 = vmatpush.msra.mxu0 %v30
  %507 = vmatmul.f32.gmra.mxu0 %v444
  %v508 = vpop.f32.mrf.mxu0
  %v509 = vadd.f32 0.0, %v508
  %510 = vdwg.mxu0
  %v511 = vadd.f32 %v448, %v469
  %v512 = vxor.u32 %v511, 2147483648
  %v513 = vmul.f32 %v512, 1.442695
  %v514 = vpow.pop %v513
  %v515 = vadd.f32 %v514, 1.0
  %v516 = vrcp.pop %v515
  %v517 = vmul.f32 %v515, %v516
  %v518 = vsub.f32 1.0, %v517
  %v519 = vmul.f32 %v516, %v518
  %v520 = vadd.f32 %v516, %v519
  %vm521 = vweird.f32 %v515
  %vm522 = vweird.f32 %v516
  %vm523 = vmor %vm521, %vm522
  %v524 = vsel %vm523, %v516, %v520
  %v525 = vand.u32 2147483647, %v515
  %vm526 = vcmp.eq.f32.partialorder %v525, 8.507059e+37
  %v527 = vand.u32 %v515, 2147483648
  %v528 = vor.u32 1.1754944e-38, %v527
  %v529 = vsel %vm526, %v528, %v524
  %v530 = vmul.f32 1.0, %v529
  %v531 = vadd.f32 %v449, %v489
  %v532 = vxor.u32 %v531, 2147483648
  %v533 = vmul.f32 %v532, 1.442695
  %v534 = vpow.pop %v533
  %v535 = vadd.f32 %v534, 1.0
  %v536 = vrcp.pop %v535
  %v537 = vmul.f32 %v535, %v536
  %v538 = vsub.f32 1.0, %v537
  %v539 = vmul.f32 %v536, %v538
  %v540 = vadd.f32 %v536, %v539
  %vm541 = vweird.f32 %v535
  %vm542 = vweird.f32 %v536
  %vm543 = vmor %vm541, %vm542
  %v544 = vsel %vm543, %v536, %v540
  %v545 = vand.u32 2147483647, %v535
  %vm546 = vcmp.eq.f32.partialorder %v545, 8.507059e+37
  %v547 = vand.u32 %v535, 2147483648
  %v548 = vor.u32 1.1754944e-38, %v547
  %v549 = vsel %vm546, %v548, %v544
  %v550 = vmul.f32 1.0, %v549
  %v551 = vadd.f32 %v509, %v182
  %v552 = vmul.f32 %v530, %v551
  %v553 = vadd.f32 %v450, %v552
  %v554 = vtanh.pop %v553
  %v555 = vsub.f32 %v444, %v554
  %v556 = vmul.f32 %v550, %v555
  %v557 = vadd.f32 %v554, %v556
  %s558 = sadd.s32 %s76, 3
  %v559 = vstv %s558
  %vm560 = vcmp.lt.s32.totalorder %v559, %v26
  %v561 = vsel %vm560, 1, 0
  %562 = vset.pattern.permute.xlu0 0
  %563 = vperm.xlu0 %562, %v561
  %v564 = vpop.permute.xlu0 %563
  %vm565 = vcmp.eq.s32.totalorder %v564, 1
  %v566 = vperm.slane %v444, 0
  %v567 = vsel %vm565, %v557, %v566
  %s568 = scalar_lea.vmem %s5, 24
  %569 = vst [vmem:[%s568] sm:$0xff] %v567
  %s570 = scalar_lea.vmem %s1, 96
  %v571 = vld [vmem:[%s570] sm:$0xff]
  %v572 = vld [vmem:[%s570 + $0x8] sm:$0xff]
  %v573 = vld [vmem:[%s570 + $0x10] sm:$0xff]
  %574 = vmatpush.msra.mxu0 %v73
  %575 = vmatpush.msra.mxu0 %v70
  %576 = vmatpush.msra.mxu0 %v67
  %577 = vmatpush.msra.mxu0 %v64
  %578 = vmatpush.msra.mxu0 %v61
  %579 = vmatpush.msra.mxu0 %v58
  %580 = vmatpush.msra.mxu0 %v55
  %581 = vmatpush.msra.mxu0 %v52
  %582 = vmatpush.msra.mxu0 %v49
  %583 = vmatpush.msra.mxu0 %v46
  %584 = vmatpush.msra.mxu0 %v43
  %585 = vmatpush.msra.mxu0 %v40
  %586 = vmatpush.msra.mxu0 %v37
  %587 = vmatpush.msra.mxu0 %v34
  %588 = vmatpush.msra.mxu0 %v31
  %589 = vmatpush.msra.mxu0 %v28
  %590 = vmatmul.f32.gmra.mxu0 %v567
  %v591 = vpop.f32.mrf.mxu0
  %v592 = vadd.f32 0.0, %v591
  %593 = vdwg.mxu0
  %594 = vmatpush.msra.mxu0 %v74
  %595 = vmatpush.msra.mxu0 %v71
  %596 = vmatpush.msra.mxu0 %v68
  %597 = vmatpush.msra.mxu0 %v65
  %598 = vmatpush.msra.mxu0 %v62
  %599 = vmatpush.msra.mxu0 %v59
  %600 = vmatpush.msra.mxu0 %v56
  %601 = vmatpush.msra.mxu0 %v53
  %602 = vmatpush.msra.mxu0 %v50
  %603 = vmatpush.msra.mxu0 %v47
  %604 = vmatpush.msra.mxu0 %v44
  %605 = vmatpush.msra.mxu0 %v41
  %606 = vmatpush.msra.mxu0 %v38
  %607 = vmatpush.msra.mxu0 %v35
  %608 = vmatpush.msra.mxu0 %v32
  %609 = vmatpush.msra.mxu0 %v29
  %610 = vmatmul.f32.gmra.mxu0 %v567
  %v611 = vpop.f32.mrf.mxu0
  %v612 = vadd.f32 0.0, %v611
  %613 = vdwg.mxu0
  %614 = vmatpush.msra.mxu0 %v75
  %615 = vmatpush.msra.mxu0 %v72
  %616 = vmatpush.msra.mxu0 %v69
  %617 = vmatpush.msra.mxu0 %v66
  %618 = vmatpush.msra.mxu0 %v63
  %619 = vmatpush.msra.mxu0 %v60
  %620 = vmatpush.msra.mxu0 %v57
  %621 = vmatpush.msra.mxu0 %v54
  %622 = vmatpush.msra.mxu0 %v51
  %623 = vmatpush.msra.mxu0 %v48
  %624 = vmatpush.msra.mxu0 %v45
  %625 = vmatpush.msra.mxu0 %v42
  %626 = vmatpush.msra.mxu0 %v39
  %627 = vmatpush.msra.mxu0 %v36
  %628 = vmatpush.msra.mxu0 %v33
  %629 = vmatpush.msra.mxu0 %v30
  %630 = vmatmul.f32.gmra.mxu0 %v567
  %v631 = vpop.f32.mrf.mxu0
  %v632 = vadd.f32 0.0, %v631
  %633 = vdwg.mxu0
  %v634 = vadd.f32 %v571, %v592
  %v635 = vxor.u32 %v634, 2147483648
  %v636 = vmul.f32 %v635, 1.442695
  %v637 = vpow.pop %v636
  %v638 = vadd.f32 %v637, 1.0
  %v639 = vrcp.pop %v638
  %v640 = vmul.f32 %v638, %v639
  %v641 = vsub.f32 1.0, %v640
  %v642 = vmul.f32 %v639, %v641
  %v643 = vadd.f32 %v639, %v642
  %vm644 = vweird.f32 %v638
  %vm645 = vweird.f32 %v639
  %vm646 = vmor %vm644, %vm645
  %v647 = vsel %vm646, %v639, %v643
  %v648 = vand.u32 2147483647, %v638
  %vm649 = vcmp.eq.f32.partialorder %v648, 8.507059e+37
  %v650 = vand.u32 %v638, 2147483648
  %v651 = vor.u32 1.1754944e-38, %v650
  %v652 = vsel %vm649, %v651, %v647
  %v653 = vmul.f32 1.0, %v652
  %v654 = vadd.f32 %v572, %v612
  %v655 = vxor.u32 %v654, 2147483648
  %v656 = vmul.f32 %v655, 1.442695
  %v657 = vpow.pop %v656
  %v658 = vadd.f32 %v657, 1.0
  %v659 = vrcp.pop %v658
  %v660 = vmul.f32 %v658, %v659
  %v661 = vsub.f32 1.0, %v660
  %v662 = vmul.f32 %v659, %v661
  %v663 = vadd.f32 %v659, %v662
  %vm664 = vweird.f32 %v658
  %vm665 = vweird.f32 %v659
  %vm666 = vmor %vm664, %vm665
  %v667 = vsel %vm666, %v659, %v663
  %v668 = vand.u32 2147483647, %v658
  %vm669 = vcmp.eq.f32.partialorder %v668, 8.507059e+37
  %v670 = vand.u32 %v658, 2147483648
  %v671 = vor.u32 1.1754944e-38, %v670
  %v672 = vsel %vm669, %v671, %v667
  %v673 = vmul.f32 1.0, %v672
  %v674 = vadd.f32 %v632, %v182
  %v675 = vmul.f32 %v653, %v674
  %v676 = vadd.f32 %v573, %v675
  %v677 = vtanh.pop %v676
  %v678 = vsub.f32 %v567, %v677
  %v679 = vmul.f32 %v673, %v678
  %v680 = vadd.f32 %v677, %v679
  %s681 = sadd.s32 %s76, 4
  %v682 = vstv %s681
  %vm683 = vcmp.lt.s32.totalorder %v682, %v26
  %v684 = vsel %vm683, 1, 0
  %685 = vset.pattern.permute.xlu0 0
  %686 = vperm.xlu0 %685, %v684
  %v687 = vpop.permute.xlu0 %686
  %vm688 = vcmp.eq.s32.totalorder %v687, 1
  %v689 = vperm.slane %v567, 0
  %v690 = vsel %vm688, %v680, %v689
  %s691 = scalar_lea.vmem %s5, 32
  %692 = vst [vmem:[%s691] sm:$0xff] %v690
  %s693 = scalar_lea.vmem %s1, 120
  %v694 = vld [vmem:[%s693] sm:$0xff]
  %v695 = vld [vmem:[%s693 + $0x8] sm:$0xff]
  %v696 = vld [vmem:[%s693 + $0x10] sm:$0xff]
  %697 = vmatpush.msra.mxu0 %v73
  %698 = vmatpush.msra.mxu0 %v70
  %699 = vmatpush.msra.mxu0 %v67
  %700 = vmatpush.msra.mxu0 %v64
  %701 = vmatpush.msra.mxu0 %v61
  %702 = vmatpush.msra.mxu0 %v58
  %703 = vmatpush.msra.mxu0 %v55
  %704 = vmatpush.msra.mxu0 %v52
  %705 = vmatpush.msra.mxu0 %v49
  %706 = vmatpush.msra.mxu0 %v46
  %707 = vmatpush.msra.mxu0 %v43
  %708 = vmatpush.msra.mxu0 %v40
  %709 = vmatpush.msra.mxu0 %v37
  %710 = vmatpush.msra.mxu0 %v34
  %711 = vmatpush.msra.mxu0 %v31
  %712 = vmatpush.msra.mxu0 %v28
  %713 = vmatmul.f32.gmra.mxu0 %v690
  %v714 = vpop.f32.mrf.mxu0
  %v715 = vadd.f32 0.0, %v714
  %716 = vdwg.mxu0
  %717 = vmatpush.msra.mxu0 %v74
  %718 = vmatpush.msra.mxu0 %v71
  %719 = vmatpush.msra.mxu0 %v68
  %720 = vmatpush.msra.mxu0 %v65
  %721 = vmatpush.msra.mxu0 %v62
  %722 = vmatpush.msra.mxu0 %v59
  %723 = vmatpush.msra.mxu0 %v56
  %724 = vmatpush.msra.mxu0 %v53
  %725 = vmatpush.msra.mxu0 %v50
  %726 = vmatpush.msra.mxu0 %v47
  %727 = vmatpush.msra.mxu0 %v44
  %728 = vmatpush.msra.mxu0 %v41
  %729 = vmatpush.msra.mxu0 %v38
  %730 = vmatpush.msra.mxu0 %v35
  %731 = vmatpush.msra.mxu0 %v32
  %732 = vmatpush.msra.mxu0 %v29
  %733 = vmatmul.f32.gmra.mxu0 %v690
  %v734 = vpop.f32.mrf.mxu0
  %v735 = vadd.f32 0.0, %v734
  %736 = vdwg.mxu0
  %737 = vmatpush.msra.mxu0 %v75
  %738 = vmatpush.msra.mxu0 %v72
  %739 = vmatpush.msra.mxu0 %v69
  %740 = vmatpush.msra.mxu0 %v66
  %741 = vmatpush.msra.mxu0 %v63
  %742 = vmatpush.msra.mxu0 %v60
  %743 = vmatpush.msra.mxu0 %v57
  %744 = vmatpush.msra.mxu0 %v54
  %745 = vmatpush.msra.mxu0 %v51
  %746 = vmatpush.msra.mxu0 %v48
  %747 = vmatpush.msra.mxu0 %v45
  %748 = vmatpush.msra.mxu0 %v42
  %749 = vmatpush.msra.mxu0 %v39
  %750 = vmatpush.msra.mxu0 %v36
  %751 = vmatpush.msra.mxu0 %v33
  %752 = vmatpush.msra.mxu0 %v30
  %753 = vmatmul.f32.gmra.mxu0 %v690
  %v754 = vpop.f32.mrf.mxu0
  %v755 = vadd.f32 0.0, %v754
  %756 = vdwg.mxu0
  %v757 = vadd.f32 %v694, %v715
  %v758 = vxor.u32 %v757, 2147483648
  %v759 = vmul.f32 %v758, 1.442695
  %v760 = vpow.pop %v759
  %v761 = vadd.f32 %v760, 1.0
  %v762 = vrcp.pop %v761
  %v763 = vmul.f32 %v761, %v762
  %v764 = vsub.f32 1.0, %v763
  %v765 = vmul.f32 %v762, %v764
  %v766 = vadd.f32 %v762, %v765
  %vm767 = vweird.f32 %v761
  %vm768 = vweird.f32 %v762
  %vm769 = vmor %vm767, %vm768
  %v770 = vsel %vm769, %v762, %v766
  %v771 = vand.u32 2147483647, %v761
  %vm772 = vcmp.eq.f32.partialorder %v771, 8.507059e+37
  %v773 = vand.u32 %v761, 2147483648
  %v774 = vor.u32 1.1754944e-38, %v773
  %v775 = vsel %vm772, %v774, %v770
  %v776 = vmul.f32 1.0, %v775
  %v777 = vadd.f32 %v695, %v735
  %v778 = vxor.u32 %v777, 2147483648
  %v779 = vmul.f32 %v778, 1.442695
  %v780 = vpow.pop %v779
  %v781 = vadd.f32 %v780, 1.0
  %v782 = vrcp.pop %v781
  %v783 = vmul.f32 %v781, %v782
  %v784 = vsub.f32 1.0, %v783
  %v785 = vmul.f32 %v782, %v784
  %v786 = vadd.f32 %v782, %v785
  %vm787 = vweird.f32 %v781
  %vm788 = vweird.f32 %v782
  %vm789 = vmor %vm787, %vm788
  %v790 = vsel %vm789, %v782, %v786
  %v791 = vand.u32 2147483647, %v781
  %vm792 = vcmp.eq.f32.partialorder %v791, 8.507059e+37
  %v793 = vand.u32 %v781, 2147483648
  %v794 = vor.u32 1.1754944e-38, %v793
  %v795 = vsel %vm792, %v794, %v790
  %v796 = vmul.f32 1.0, %v795
  %v797 = vadd.f32 %v755, %v182
  %v798 = vmul.f32 %v776, %v797
  %v799 = vadd.f32 %v696, %v798
  %v800 = vtanh.pop %v799
  %v801 = vsub.f32 %v690, %v800
  %v802 = vmul.f32 %v796, %v801
  %v803 = vadd.f32 %v800, %v802
  %s804 = sadd.s32 %s76, 5
  %v805 = vstv %s804
  %vm806 = vcmp.lt.s32.totalorder %v805, %v26
  %v807 = vsel %vm806, 1, 0
  %808 = vset.pattern.permute.xlu0 0
  %809 = vperm.xlu0 %808, %v807
  %v810 = vpop.permute.xlu0 %809
  %vm811 = vcmp.eq.s32.totalorder %v810, 1
  %v812 = vperm.slane %v690, 0
  %v813 = vsel %vm811, %v803, %v812
  %s814 = scalar_lea.vmem %s5, 40
  %815 = vst [vmem:[%s814] sm:$0xff] %v813
  %816 = vst [vmem:[#allocation2] sm:$0xff] %v813
  // Predicated region
  $region26: #{custom_gru_forward.2} parent=0 // pred_check
    _
  $region27: #{custom_gru_forward.2} parent=0 // pred_check_branch
    %818 = sbr.rel (0) target = $region29
  $region28: #{custom_gru_forward.2} parent=0 // pred_region
    _
  $region29: #{custom_gru_forward.2} parent=0 // pred_fallthru
    _
  // Predicated region
  $region30: #{custom_gru_forward.2} parent=0 // pred_check
    _
  $region31: #{custom_gru_forward.2} parent=0 // pred_check_branch
    %820 = sbr.rel (0) target = $region33
  $region32: #{custom_gru_forward.2} parent=0 // pred_region
    _
  $region33: #{custom_gru_forward.2} parent=0 // pred_fallthru
    _

</llo_original>
